<compile_context>
chip_gen: v7x
topology: tpu7x:2x2x1
jax: 0.10.0
libtpu: 0.0.40
codegen_flags: <defaults>
</compile_context>

<pallas_src>
import jax
import jax.numpy as jnp
from jax.experimental import pallas as pl
from jax.experimental.pallas import tpu as pltpu

HIDDEN = 64     # fc1/fc2 output width
LANES = 128     # f32 vreg lane width; every weight/param slab is 128-lane dense


def critic_kernel(s_ref, a_ref, w1_ref, w2x_ref, w2a_ref, p_ref, out_ref):
    """Single-invocation (gridless) Critic forward.

    s_ref:   (B, obs_dim)   raw observations+goal
    a_ref:   (B, act_dim)   raw actions
    w1_ref:  (obs_dim, 128) fc1 weight, cols [0:64) live, rest zero
    w2x_ref: (128, 128)     fc2 weight rows for the BN output, live block
                            [0:64, 0:64), rest zero
    w2a_ref: (act_dim, 128) fc2 weight rows for the action, cols [0:64) live
    p_ref:   (8, 128)       row0=b1, row1=gamma, row2=beta, row3=b2,
                            row4=b3 (lane 0), row5=w3 (lanes [0:64))
    out_ref: (B, 128)       sigmoid(fc3) broadcast lane-dense; Q is lane 0
    """
    s = s_ref[...]
    a = a_ref[...]
    p = p_ref[...]
    b1 = p[0:1, :]
    gamma = p[1:2, :]
    beta = p[2:3, :]
    b2 = p[3:4, :]
    b3 = p[4:5, 0:1]
    w3 = p[5:6, :]

    # ---- fc1 + relu (output lanes [64:128) stay exactly 0: zero cols, zero b1 pad)
    h1 = jnp.dot(s, w1_ref[...], preferred_element_type=jnp.float32) + b1
    h1 = jnp.maximum(h1, 0.0)

    # ---- BatchNorm1d, training mode: biased batch stats, centered variance,
    #      folded into one scale*(h-mean)+beta pass. Padded lanes: mean=0,
    #      var=0, gamma_pad=0 -> scale=0 -> output stays 0.
    inv_b = jnp.float32(1.0 / h1.shape[0])
    mean = jnp.sum(h1, axis=0, keepdims=True) * inv_b
    d = h1 - mean
    var = jnp.sum(d * d, axis=0, keepdims=True) * inv_b
    scale = gamma * jax.lax.rsqrt(var + 1e-5)
    x = d * scale + beta

    # ---- fc2 + relu, concat-free: concat([x, a]) @ W2 == x @ W2_x + a @ W2_a
    h2 = (jnp.dot(x, w2x_ref[...], preferred_element_type=jnp.float32)
          + jnp.dot(a, w2a_ref[...], preferred_element_type=jnp.float32)
          + b2)
    h2 = jnp.maximum(h2, 0.0)

    # ---- fc3 + sigmoid on the VPU/XLU/EUP path (no MXU push, no W3 DMA):
    #      h2 pad lanes and w3 pad lanes are both zero, so the reduce is exact.
    q = jnp.sum(h2 * w3, axis=-1, keepdims=True) + b3
    sig = 0.5 * (jnp.tanh(0.5 * q) + 1.0)            # == sigmoid(q), EUP path
    out_ref[...] = jnp.broadcast_to(sig, out_ref.shape)  # lane-dense store


def init_params(key, obs_dim, act_dim, hidden=HIDDEN):
    """PyTorch-default-style init (U(-1/sqrt(fan_in), +)); weights are stored
    transposed to (in_features, out_features)."""
    ks = jax.random.split(key, 6)

    def linear(kw, kb, fan_in, fan_out):
        bound = 1.0 / jnp.sqrt(jnp.float32(fan_in))
        w = jax.random.uniform(kw, (fan_in, fan_out), jnp.float32, -bound, bound)
        b = jax.random.uniform(kb, (1, fan_out), jnp.float32, -bound, bound)
        return w, b

    w1, b1 = linear(ks[0], ks[1], obs_dim, hidden)
    g1 = jnp.ones((1, hidden), jnp.float32)       # bn1 weight (gamma)
    beta1 = jnp.zeros((1, hidden), jnp.float32)   # bn1 bias (beta)
    w2, b2 = linear(ks[2], ks[3], hidden + act_dim, hidden)
    w3, b3 = linear(ks[4], ks[5], hidden, 1)
    return (w1, b1, g1, beta1, w2, b2, w3, b3)


def pack_params(params, obs_dim, act_dim):
    """One-time packing of the 9 small parameter arrays into lane-dense slabs.
    Done outside the hot path; the padding MUST stay zero (BN/fc3 rely on it)."""
    (w1, b1, g1, beta1, w2, b2, w3, b3) = params
    assert obs_dim <= LANES and act_dim <= LANES

    W1p = jnp.zeros((obs_dim, LANES), jnp.float32).at[:, :HIDDEN].set(w1)
    W2x = jnp.zeros((LANES, LANES), jnp.float32).at[:HIDDEN, :HIDDEN].set(w2[:HIDDEN, :])
    W2a = jnp.zeros((act_dim, LANES), jnp.float32).at[:, :HIDDEN].set(w2[HIDDEN:, :])

    P = jnp.zeros((8, LANES), jnp.float32)
    P = P.at[0, :HIDDEN].set(b1.reshape(-1))
    P = P.at[1, :HIDDEN].set(g1.reshape(-1))
    P = P.at[2, :HIDDEN].set(beta1.reshape(-1))
    P = P.at[3, :HIDDEN].set(b2.reshape(-1))
    P = P.at[4, 0].set(b3.reshape(-1)[0])
    P = P.at[5, :HIDDEN].set(w3.reshape(-1))
    return W1p, W2x, W2a, P


def critic_forward(s, a, W1p, W2x, W2a, P):
    """Runs one Critic forward. Returns the lane-dense (B, 128) output slab;
    the real Q value is lane 0 (slice lazily at the consumer)."""
    B = s.shape[0]
    vmem = pl.BlockSpec(memory_space=pltpu.MemorySpace.VMEM)
    return pl.pallas_call(
        critic_kernel,
        out_shape=jax.ShapeDtypeStruct((B, LANES), jnp.float32),
        in_specs=[vmem] * 6,
        out_specs=vmem,
    )(s, a, W1p, W2x, W2a, P)


def reference_forward(s, a, params):
    """Pure-JAX reference matching the PyTorch Critic (training-mode BN)."""
    (w1, b1, g1, beta1, w2, b2, w3, b3) = params
    h1 = jnp.maximum(s @ w1 + b1, 0.0)
    mean = jnp.mean(h1, axis=0, keepdims=True)
    var = jnp.mean((h1 - mean) ** 2, axis=0, keepdims=True)
    x = (h1 - mean) / jnp.sqrt(var + 1e-5) * g1 + beta1
    xa = jnp.concatenate([x, a], axis=1)
    h2 = jnp.maximum(xa @ w2 + b2, 0.0)
    return jax.nn.sigmoid(h2 @ w3 + b3)


if __name__ == "__main__":
    # small shapes implied by the module: obs_dim = env.obs_dim + env.goal_dim
    B, OBS_GOAL_DIM, ACT_DIM = 8, 24, 8

    key = jax.random.PRNGKey(0)
    k_s, k_a, k_p = jax.random.split(key, 3)

    s = jax.random.normal(k_s, (B, OBS_GOAL_DIM), jnp.float32)
    a = jax.random.normal(k_a, (B, ACT_DIM), jnp.float32)
    params = init_params(k_p, OBS_GOAL_DIM, ACT_DIM)
    W1p, W2x, W2a, P = pack_params(params, OBS_GOAL_DIM, ACT_DIM)  # one-time

    q_wide = critic_forward(s, a, W1p, W2x, W2a, P)
    q_wide = jax.block_until_ready(q_wide)
    q = q_wide[:, :1]                      # lazy lane-0 slice at the consumer

    q_ref = reference_forward(s, a, params)
    assert q.shape == (B, 1)
    assert jnp.allclose(q, q_ref, atol=1e-4, rtol=1e-4), (q, q_ref)

    print("KERNEL_OK")
</pallas_src>

<mosaic_0001>
module attributes {stable_mosaic.version = 11 : i64} {
  func.func @critic_kernel(%arg0: memref<8x24xf32, #tpu.memory_space<vmem>>, %arg1: memref<8x8xf32, #tpu.memory_space<vmem>>, %arg2: memref<24x128xf32, #tpu.memory_space<vmem>>, %arg3: memref<128x128xf32, #tpu.memory_space<vmem>>, %arg4: memref<8x128xf32, #tpu.memory_space<vmem>>, %arg5: memref<8x128xf32, #tpu.memory_space<vmem>>, %arg6: memref<8x128xf32, #tpu.memory_space<vmem>>) attributes {dimension_semantics = [], scalar_prefetch = 0 : i64, scratch_operands = 0 : i64, tpu.core_type = #tpu.core_type<tc>} {
    %c0 = arith.constant 0 : index
    %c0_0 = arith.constant 0 : index
    %0 = vector.load %arg0[%c0, %c0_0] : memref<8x24xf32, #tpu.memory_space<vmem>>, vector<8x24xf32>
    %c0_1 = arith.constant 0 : index
    %c0_2 = arith.constant 0 : index
    %1 = vector.load %arg1[%c0_1, %c0_2] : memref<8x8xf32, #tpu.memory_space<vmem>>, vector<8x8xf32>
    %c0_3 = arith.constant 0 : index
    %c0_4 = arith.constant 0 : index
    %2 = vector.load %arg5[%c0_3, %c0_4] : memref<8x128xf32, #tpu.memory_space<vmem>>, vector<8x128xf32>
    %3 = vector.extract_strided_slice %2 {offsets = [0, 0], sizes = [1, 128], strides = [1, 1]} : vector<8x128xf32> to vector<1x128xf32>
    %4 = vector.extract_strided_slice %2 {offsets = [1, 0], sizes = [1, 128], strides = [1, 1]} : vector<8x128xf32> to vector<1x128xf32>
    %5 = vector.extract_strided_slice %2 {offsets = [2, 0], sizes = [1, 128], strides = [1, 1]} : vector<8x128xf32> to vector<1x128xf32>
    %6 = vector.extract_strided_slice %2 {offsets = [3, 0], sizes = [1, 128], strides = [1, 1]} : vector<8x128xf32> to vector<1x128xf32>
    %7 = vector.extract_strided_slice %2 {offsets = [4, 0], sizes = [1, 1], strides = [1, 1]} : vector<8x128xf32> to vector<1x1xf32>
    %8 = vector.extract_strided_slice %2 {offsets = [5, 0], sizes = [1, 128], strides = [1, 1]} : vector<8x128xf32> to vector<1x128xf32>
    %c0_5 = arith.constant 0 : index
    %c0_6 = arith.constant 0 : index
    %9 = vector.load %arg2[%c0_5, %c0_6] : memref<24x128xf32, #tpu.memory_space<vmem>>, vector<24x128xf32>
    %cst = arith.constant dense<0.000000e+00> : vector<8x128xf32>
    %10 = tpu.matmul %0, %9, %cst {dimension_numbers = #tpu.dot_dimension_numbers<[1], [0], [0], [1], [0, 0, 1, 1], [], []>} : vector<8x24xf32>, vector<24x128xf32>, vector<8x128xf32> -> vector<8x128xf32>
    %11 = vector.broadcast %3 : vector<1x128xf32> to vector<8x128xf32>
    %12 = arith.addf %10, %11 : vector<8x128xf32>
    %cst_7 = arith.constant 0.000000e+00 : f32
    %13 = vector.broadcast %cst_7 : f32 to vector<8x128xf32>
    %14 = arith.maximumf %12, %13 : vector<8x128xf32>
    %cst_8 = arith.constant dense<0.000000e+00> : vector<128xf32>
    %15 = vector.multi_reduction <add>, %14, %cst_8 [0] : vector<8x128xf32> to vector<128xf32>
    %16 = vector.shape_cast %15 : vector<128xf32> to vector<1x128xf32>
    %cst_9 = arith.constant 1.250000e-01 : f32
    %17 = vector.broadcast %cst_9 : f32 to vector<1x128xf32>
    %18 = arith.mulf %16, %17 : vector<1x128xf32>
    %19 = vector.broadcast %18 : vector<1x128xf32> to vector<8x128xf32>
    %20 = arith.subf %14, %19 : vector<8x128xf32>
    %21 = arith.mulf %20, %20 : vector<8x128xf32>
    %cst_10 = arith.constant dense<0.000000e+00> : vector<128xf32>
    %22 = vector.multi_reduction <add>, %21, %cst_10 [0] : vector<8x128xf32> to vector<128xf32>
    %23 = vector.shape_cast %22 : vector<128xf32> to vector<1x128xf32>
    %cst_11 = arith.constant 1.250000e-01 : f32
    %24 = vector.broadcast %cst_11 : f32 to vector<1x128xf32>
    %25 = arith.mulf %23, %24 : vector<1x128xf32>
    %cst_12 = arith.constant 9.99999974E-6 : f32
    %26 = vector.broadcast %cst_12 : f32 to vector<1x128xf32>
    %27 = arith.addf %25, %26 : vector<1x128xf32>
    %28 = math.rsqrt %27 : vector<1x128xf32>
    %29 = arith.mulf %4, %28 : vector<1x128xf32>
    %30 = vector.broadcast %29 : vector<1x128xf32> to vector<8x128xf32>
    %31 = arith.mulf %20, %30 : vector<8x128xf32>
    %32 = vector.broadcast %5 : vector<1x128xf32> to vector<8x128xf32>
    %33 = arith.addf %31, %32 : vector<8x128xf32>
    %c0_13 = arith.constant 0 : index
    %c0_14 = arith.constant 0 : index
    %34 = vector.load %arg3[%c0_13, %c0_14] : memref<128x128xf32, #tpu.memory_space<vmem>>, vector<128x128xf32>
    %cst_15 = arith.constant dense<0.000000e+00> : vector<8x128xf32>
    %35 = tpu.matmul %33, %34, %cst_15 {dimension_numbers = #tpu.dot_dimension_numbers<[1], [0], [0], [1], [0, 0, 1, 1], [], []>} : vector<8x128xf32>, vector<128x128xf32>, vector<8x128xf32> -> vector<8x128xf32>
    %c0_16 = arith.constant 0 : index
    %c0_17 = arith.constant 0 : index
    %36 = vector.load %arg4[%c0_16, %c0_17] : memref<8x128xf32, #tpu.memory_space<vmem>>, vector<8x128xf32>
    %cst_18 = arith.constant dense<0.000000e+00> : vector<8x128xf32>
    %37 = tpu.matmul %1, %36, %cst_18 {dimension_numbers = #tpu.dot_dimension_numbers<[1], [0], [0], [1], [0, 0, 1, 1], [], []>} : vector<8x8xf32>, vector<8x128xf32>, vector<8x128xf32> -> vector<8x128xf32>
    %38 = arith.addf %35, %37 : vector<8x128xf32>
    %39 = vector.broadcast %6 : vector<1x128xf32> to vector<8x128xf32>
    %40 = arith.addf %38, %39 : vector<8x128xf32>
    %cst_19 = arith.constant 0.000000e+00 : f32
    %41 = vector.broadcast %cst_19 : f32 to vector<8x128xf32>
    %42 = arith.maximumf %40, %41 : vector<8x128xf32>
    %43 = vector.broadcast %8 : vector<1x128xf32> to vector<8x128xf32>
    %44 = arith.mulf %42, %43 : vector<8x128xf32>
    %cst_20 = arith.constant dense<0.000000e+00> : vector<8xf32>
    %45 = vector.multi_reduction <add>, %44, %cst_20 [1] : vector<8x128xf32> to vector<8xf32>
    %46 = vector.shape_cast %45 : vector<8xf32> to vector<8x1xf32>
    %47 = vector.broadcast %7 : vector<1x1xf32> to vector<8x1xf32>
    %48 = arith.addf %46, %47 : vector<8x1xf32>
    %cst_21 = arith.constant 5.000000e-01 : f32
    %49 = vector.broadcast %cst_21 : f32 to vector<8x1xf32>
    %50 = arith.mulf %49, %48 : vector<8x1xf32>
    %51 = math.tanh %50 : vector<8x1xf32>
    %cst_22 = arith.constant 1.000000e+00 : f32
    %52 = vector.broadcast %cst_22 : f32 to vector<8x1xf32>
    %53 = arith.addf %51, %52 : vector<8x1xf32>
    %cst_23 = arith.constant 5.000000e-01 : f32
    %54 = vector.broadcast %cst_23 : f32 to vector<8x1xf32>
    %55 = arith.mulf %54, %53 : vector<8x1xf32>
    %56 = vector.shape_cast %55 : vector<8x1xf32> to vector<8x1xf32>
    %57 = vector.broadcast %56 : vector<8x1xf32> to vector<8x128xf32>
    %c0_24 = arith.constant 0 : index
    %c0_25 = arith.constant 0 : index
    %58 = vector.load %arg6[%c0_24, %c0_25] : memref<8x128xf32, #tpu.memory_space<vmem>>, vector<8x128xf32>
    tpu.vector_store %arg6[%c0_24, %c0_25], %57 {strides = array<i32>} : memref<8x128xf32, #tpu.memory_space<vmem>>, vector<8x128xf32>,
    return
  }
}

</mosaic_0001>

<llo_original>
// kernel: tpu_custom_call.1
$region0: #{tpu_custom_call.1}
  #allocation0 [shape = 'u32[]', space=smem, size = 0x4, offset = 0x4, fixed_abs, tag = 'smem constant byte address 0x4 - core index']
  #allocation1 [shape = 'u32[144,128]{1,0:T(1,128)}', space=vmem, size = 0x12000, scoped, tag = 'internal scratch']
  %s0 = inlined_call_operand.hbm [shape: f32[8,24], index: 0, kind: input, shape index: {}]
  %s1 = inlined_call_operand.hbm [shape: f32[8,8], index: 1, kind: input, shape index: {}]
  %s2 = inlined_call_operand.hbm [shape: f32[24,128], index: 2, kind: input, shape index: {}]
  %s3 = inlined_call_operand.hbm [shape: f32[128,128], index: 3, kind: input, shape index: {}]
  %s4 = inlined_call_operand.vmem [shape: f32[8,128], index: 4, kind: input, shape index: {}]
  %s5 = inlined_call_operand.vmem [shape: f32[8,128], index: 5, kind: input, shape index: {}]
  %s6 = inlined_call_operand.hbm [shape: f32[8,128], index: 6, kind: output, shape index: {}]
  %s7 = sld [smem:[#allocation0]]
  $region50: #{tpu_custom_call.1} parent=0
    _
  %s9 = ssub.s32 1, %s7
  %s10 = scalar_select 0, %s9, %s7
  $region1: #{tpu_custom_call.1} parent=0
    #allocation2 [shape = 'u8[4096]{0}', space=vmem, size = 0x1000, scoped, tag = 'input window, operand 0, single buffered']
    #allocation3 [shape = 's32[1]{0}', space=sflag, size = 0x4, scoped, tag = 'scoped memory for tpu_custom_call.1']
    #allocation4 [shape = 's32[1]{0}', space=sflag, size = 0x4, scoped, tag = 'scoped memory for tpu_custom_call.1']
    #allocation5 [shape = 'u8[4096]{0}', space=vmem, size = 0x1000, scoped, tag = 'input window, operand 1, single buffered']
    #allocation6 [shape = 's32[1]{0}', space=sflag, size = 0x4, scoped, tag = 'scoped memory for tpu_custom_call.1']
    #allocation7 [shape = 'u8[12288]{0}', space=vmem, size = 0x3000, scoped, tag = 'input window, operand 2, single buffered']
    #allocation8 [shape = 'u8[65536]{0}', space=vmem, size = 0x10000, scoped, tag = 'input window, operand 3, single buffered']
    #allocation9 [shape = 's32[1]{0}', space=sflag, size = 0x4, scoped, tag = 'scoped memory for tpu_custom_call.1']
    #allocation10 [shape = 'u8[4096]{0}', space=vmem, size = 0x1000, scoped, tag = 'output window, operand 0, single buffered']
    %11 = vsyncpa [#allocation3], 0
    %12 = vsyncpa [#allocation6], 0
    %13 = vsyncpa [#allocation9], 0
    %14 = vsyncpa [#allocation4], 0
    // Predicated region
    $region2: #{tpu_custom_call.1} parent=1 // pred_check
      _
    $region3: #{tpu_custom_call.1} parent=1 // pred_check_branch
      %16 = sbr.rel (0) target = $region5
    $region4: #{tpu_custom_call.1} parent=1 // pred_region
      %s18 = ssub.s32 128, 128
      %19 = vsyncadd [#allocation3], %s18
      %s21 = sshll.u32 [#allocation2], 4
      %s22 = int_to_ptr.vmem [resolvable:$true] %s21
      %24 = dma.hbm_to_vmem [thread:$0]  %s0, 128, %s22, [#allocation3]
    $region5: #{tpu_custom_call.1} parent=1 // pred_fallthru
      _
    // Predicated region
    $region6: #{tpu_custom_call.1} parent=1 // pred_check
      _
    $region7: #{tpu_custom_call.1} parent=1 // pred_check_branch
      %26 = sbr.rel (0) target = $region9
    $region8: #{tpu_custom_call.1} parent=1 // pred_region
      %s28 = ssub.s32 128, 128
      %29 = vsyncadd [#allocation6], %s28
      %s31 = sshll.u32 [#allocation5], 4
      %s32 = int_to_ptr.vmem [resolvable:$true] %s31
      %34 = dma.hbm_to_vmem [thread:$0]  %s1, 128, %s32, [#allocation6]
    $region9: #{tpu_custom_call.1} parent=1 // pred_fallthru
      _
    // Predicated region
    $region10: #{tpu_custom_call.1} parent=1 // pred_check
      _
    $region11: #{tpu_custom_call.1} parent=1 // pred_check_branch
      %36 = sbr.rel (0) target = $region13
    $region12: #{tpu_custom_call.1} parent=1 // pred_region
      %s38 = ssub.s32 384, 384
      %39 = vsyncadd [#allocation6], %s38
      %s40 = sshll.u32 [#allocation7], 4
      %s41 = int_to_ptr.vmem [resolvable:$true] %s40
      %46 = dma.hbm_to_vmem [thread:$0]  %s2, 384, %s41, [#allocation6], 128, 128, 8
    $region13: #{tpu_custom_call.1} parent=1 // pred_fallthru
      _
    // Predicated region
    $region14: #{tpu_custom_call.1} parent=1 // pred_check
      _
    $region15: #{tpu_custom_call.1} parent=1 // pred_check_branch
      %48 = sbr.rel (0) target = $region17
    $region16: #{tpu_custom_call.1} parent=1 // pred_region
      %s50 = ssub.s32 2048, 2048
      %51 = vsyncadd [#allocation9], %s50
      %s52 = sshll.u32 [#allocation8], 4
      %s53 = int_to_ptr.vmem [resolvable:$true] %s52
      %58 = dma.hbm_to_vmem [thread:$0]  %s3, 2048, %s53, [#allocation9], 128, 128, 8
    $region17: #{tpu_custom_call.1} parent=1 // pred_fallthru
      _
    // Predicated region
    $region18: #{tpu_custom_call.1} parent=1 // pred_check
      _
    $region19: #{tpu_custom_call.1} parent=1 // pred_check_branch
      %60 = sbr.rel (0) target = $region21
    $region20: #{tpu_custom_call.1} parent=1 // pred_region
      _
    $region21: #{tpu_custom_call.1} parent=1 // pred_fallthru
      _
    // Predicated region
    $region22: #{tpu_custom_call.1} parent=1 // pred_check
      _
    $region23: #{tpu_custom_call.1} parent=1 // pred_check_branch
      %62 = sbr.rel (0) target = $region25
    $region24: #{tpu_custom_call.1} parent=1 // pred_region
      _
    $region25: #{tpu_custom_call.1} parent=1 // pred_fallthru
      _
    // Predicated region
    $region26: #{tpu_custom_call.1} parent=1 // pred_check
      _
    $region27: #{tpu_custom_call.1} parent=1 // pred_check_branch
      %64 = sbr.rel (0) target = $region29
    $region28: #{tpu_custom_call.1} parent=1 // pred_region
      %65 = dma.done [#allocation3], 128
    $region29: #{tpu_custom_call.1} parent=1 // pred_fallthru
      _
    // Predicated region
    $region30: #{tpu_custom_call.1} parent=1 // pred_check
      _
    $region31: #{tpu_custom_call.1} parent=1 // pred_check_branch
      %67 = sbr.rel (0) target = $region33
    $region32: #{tpu_custom_call.1} parent=1 // pred_region
      %68 = dma.done [#allocation6], 128
    $region33: #{tpu_custom_call.1} parent=1 // pred_fallthru
      _
    // Predicated region
    $region34: #{tpu_custom_call.1} parent=1 // pred_check
      _
    $region35: #{tpu_custom_call.1} parent=1 // pred_check_branch
      %70 = sbr.rel (0) target = $region37
    $region36: #{tpu_custom_call.1} parent=1 // pred_region
      %71 = dma.done [#allocation6], 384
    $region37: #{tpu_custom_call.1} parent=1 // pred_fallthru
      _
    // Predicated region
    $region38: #{tpu_custom_call.1} parent=1 // pred_check
      _
    $region39: #{tpu_custom_call.1} parent=1 // pred_check_branch
      %73 = sbr.rel (0) target = $region41
    $region40: #{tpu_custom_call.1} parent=1 // pred_region
      %74 = dma.done [#allocation9], 2048
    $region41: #{tpu_custom_call.1} parent=1 // pred_fallthru
      _
    %v75 = vld [vmem:[#allocation2] sm:$0xff]
    %v76 = vld [vmem:[#allocation5] sm:$0xff]
    %v77 = vld [vmem:[%s5] sm:$0xff]
    %v78 = vld [vmem:[#allocation7] sm:$0xff]
    %v79 = vld [vmem:[#allocation7 + $0x8] sm:$0xff]
    %v80 = vld [vmem:[#allocation7 + $0x10] sm:$0xff]
    %v81 = vlaneseq
    %v82 = vshrl.u32 %v81, 7
    %v83 = vsub.s32 0, %v82
    %v84 = vrot.slane %v77, %v83
    %vm85 = vcmask 195584
    %v87 = vsel %vm85, %v75, 0
    %89 = vmatprep.subr.mxu0 0.0
    %90 = vmatpush1.msra.mxu0 %v78
    %91 = vmatprep.subr.mxu0 0.0
    %92 = vmatpush1.msra.mxu0 %v79
    %93 = vmatprep.subr.mxu0 0.0
    %94 = vmatpush1.msra.mxu0 %v80
    %95 = vmatprep.subr.mxu0 0.0
    %96 = vmatpush1.msra.mxu0 0.0
    %97 = vmatprep.subr.mxu0 0.0
    %98 = vmatpush1.msra.mxu0 0.0
    %99 = vmatprep.subr.mxu0 0.0
    %100 = vmatpush1.msra.mxu0 0.0
    %101 = vmatprep.subr.mxu0 0.0
    %102 = vmatpush1.msra.mxu0 0.0
    %103 = vmatprep.subr.mxu0 0.0
    %104 = vmatpush1.msra.mxu0 0.0
    %105 = vmatprep.subr.mxu0 0.0
    %106 = vmatpush1.msra.mxu0 0.0
    %107 = vmatprep.subr.mxu0 0.0
    %108 = vmatpush1.msra.mxu0 0.0
    %109 = vmatprep.subr.mxu0 0.0
    %110 = vmatpush1.msra.mxu0 0.0
    %111 = vmatprep.subr.mxu0 0.0
    %112 = vmatpush1.msra.mxu0 0.0
    %113 = vmatprep.subr.mxu0 0.0
    %114 = vmatpush1.msra.mxu0 0.0
    %115 = vmatprep.subr.mxu0 0.0
    %116 = vmatpush1.msra.mxu0 0.0
    %117 = vmatprep.subr.mxu0 0.0
    %118 = vmatpush1.msra.mxu0 0.0
    %119 = vmatprep.subr.mxu0 0.0
    %120 = vmatpush1.msra.mxu0 0.0
    %121 = vmatprep.subr.mxu0 0.0
    %122 = vmatpush1.msra.mxu0 0.0
    %123 = vmatprep.subr.mxu0 0.0
    %124 = vmatpush1.msra.mxu0 0.0
    %125 = vmatprep.subr.mxu0 0.0
    %126 = vmatpush1.msra.mxu0 0.0
    %127 = vmatprep.subr.mxu0 0.0
    %128 = vmatpush1.msra.mxu0 0.0
    %129 = vmatprep.subr.mxu0 0.0
    %130 = vmatpush1.msra.mxu0 0.0
    %131 = vmatprep.subr.mxu0 0.0
    %132 = vmatpush1.msra.mxu0 0.0
    %133 = vmatprep.subr.mxu0 0.0
    %134 = vmatpush1.msra.mxu0 0.0
    %135 = vmatprep.subr.mxu0 0.0
    %136 = vmatpush1.msra.mxu0 0.0
    %137 = vmatprep.subr.mxu0 0.0
    %138 = vmatpush1.msra.mxu0 0.0
    %139 = vmatprep.subr.mxu0 0.0
    %140 = vmatpush1.msra.mxu0 0.0
    %141 = vmatprep.subr.mxu0 0.0
    %142 = vmatpush1.msra.mxu0 0.0
    %143 = vmatprep.subr.mxu0 0.0
    %144 = vmatpush1.msra.mxu0 0.0
    %145 = vmatprep.subr.mxu0 0.0
    %146 = vmatpush1.msra.mxu0 0.0
    %147 = vmatprep.subr.mxu0 0.0
    %148 = vmatpush1.msra.mxu0 0.0
    %149 = vmatprep.subr.mxu0 0.0
    %150 = vmatpush1.msra.mxu0 0.0
    %151 = vmatprep.subr.mxu0 0.0
    %152 = vmatpush1.msra.mxu0 0.0
    %153 = vmatprep.mubr.f32.mxu0 0.0
    %154 = vmatmul.mubr.f32.gmra.mrb[0].mxu0 %v87
    %v155 = vpop.f32.mrb[0].mxu0
    %v156 = vadd.f32 %v84, %v155
    %v157 = vpop.f32.mrb[0].mxu0
    %158 = vdwg.mxu0
    %v159 = vmax.f32 %v156, 0.0
    %v160 = vrot.slane %v159, 4
    %v161 = vadd.f32 %v159, %v160
    %v162 = vrot.slane %v161, 2
    %v163 = vadd.f32 %v161, %v162
    %v164 = vrot.slane %v163, 1
    %v165 = vadd.f32 %v163, %v164
    %v166 = vmul.f32 %v165, 0.125
    %v167 = vsub.f32 %v159, %v166
    %v168 = vmul.f32 %v167, %v167
    %v169 = vrot.slane %v168, 4
    %v170 = vadd.f32 %v168, %v169
    %v171 = vrot.slane %v170, 2
    %v172 = vadd.f32 %v170, %v171
    %v173 = vrot.slane %v172, 1
    %v174 = vadd.f32 %v172, %v173
    %v175 = vmul.f32 %v174, 0.125
    %v176 = vadd.f32 %v175, 1e-05
    %v177 = vrsqrt.pop %v176
    %v178 = vmul.f32 %v77, %v177
    %v179 = vlaneseq
    %v180 = vshrl.u32 %v179, 7
    %v181 = vsub.s32 1, %v180
    %v182 = vrot.slane %v178, %v181
    %v183 = vmul.f32 %v167, %v182
    %v184 = vlaneseq
    %v185 = vshrl.u32 %v184, 7
    %v186 = vsub.s32 2, %v185
    %v187 = vrot.slane %v77, %v186
    %v188 = vadd.f32 %v183, %v187
    %v189 = vld [vmem:[#allocation8] sm:$0xff]
    %v190 = vld [vmem:[#allocation8 + $0x8] sm:$0xff]
    %v191 = vld [vmem:[#allocation8 + $0x10] sm:$0xff]
    %v192 = vld [vmem:[#allocation8 + $0x18] sm:$0xff]
    %v193 = vld [vmem:[#allocation8 + $0x20] sm:$0xff]
    %v194 = vld [vmem:[#allocation8 + $0x28] sm:$0xff]
    %v195 = vld [vmem:[#allocation8 + $0x30] sm:$0xff]
    %v196 = vld [vmem:[#allocation8 + $0x38] sm:$0xff]
    %v197 = vld [vmem:[#allocation8 + $0x40] sm:$0xff]
    %v198 = vld [vmem:[#allocation8 + $0x48] sm:$0xff]
    %v199 = vld [vmem:[#allocation8 + $0x50] sm:$0xff]
    %v200 = vld [vmem:[#allocation8 + $0x58] sm:$0xff]
    %v201 = vld [vmem:[#allocation8 + $0x60] sm:$0xff]
    %v202 = vld [vmem:[#allocation8 + $0x68] sm:$0xff]
    %v203 = vld [vmem:[#allocation8 + $0x70] sm:$0xff]
    %v204 = vld [vmem:[#allocation8 + $0x78] sm:$0xff]
    %v205 = vld [vmem:[%s4] sm:$0xff]
    %vm206 = vcmask 64512
    %v208 = vsel %vm206, %v76, 0
    %210 = vmatprep.subr.mxu0 0.0
    %211 = vmatpush1.msra.mxu0 %v205
    %212 = vmatprep.subr.mxu0 0.0
    %213 = vmatpush1.msra.mxu0 0.0
    %214 = vmatprep.subr.mxu0 0.0
    %215 = vmatpush1.msra.mxu0 0.0
    %216 = vmatprep.subr.mxu0 0.0
    %217 = vmatpush1.msra.mxu0 0.0
    %218 = vmatprep.subr.mxu0 0.0
    %219 = vmatpush1.msra.mxu0 0.0
    %220 = vmatprep.subr.mxu0 0.0
    %221 = vmatpush1.msra.mxu0 0.0
    %222 = vmatprep.subr.mxu0 0.0
    %223 = vmatpush1.msra.mxu0 0.0
    %224 = vmatprep.subr.mxu0 0.0
    %225 = vmatpush1.msra.mxu0 0.0
    %226 = vmatprep.subr.mxu0 0.0
    %227 = vmatpush1.msra.mxu0 0.0
    %228 = vmatprep.subr.mxu0 0.0
    %229 = vmatpush1.msra.mxu0 0.0
    %230 = vmatprep.subr.mxu0 0.0
    %231 = vmatpush1.msra.mxu0 0.0
    %232 = vmatprep.subr.mxu0 0.0
    %233 = vmatpush1.msra.mxu0 0.0
    %234 = vmatprep.subr.mxu0 0.0
    %235 = vmatpush1.msra.mxu0 0.0
    %236 = vmatprep.subr.mxu0 0.0
    %237 = vmatpush1.msra.mxu0 0.0
    %238 = vmatprep.subr.mxu0 0.0
    %239 = vmatpush1.msra.mxu0 0.0
    %240 = vmatprep.subr.mxu0 0.0
    %241 = vmatpush1.msra.mxu0 0.0
    %242 = vmatprep.subr.mxu0 0.0
    %243 = vmatpush1.msra.mxu0 0.0
    %244 = vmatprep.subr.mxu0 0.0
    %245 = vmatpush1.msra.mxu0 0.0
    %246 = vmatprep.subr.mxu0 0.0
    %247 = vmatpush1.msra.mxu0 0.0
    %248 = vmatprep.subr.mxu0 0.0
    %249 = vmatpush1.msra.mxu0 0.0
    %250 = vmatprep.subr.mxu0 0.0
    %251 = vmatpush1.msra.mxu0 0.0
    %252 = vmatprep.subr.mxu0 0.0
    %253 = vmatpush1.msra.mxu0 0.0
    %254 = vmatprep.subr.mxu0 0.0
    %255 = vmatpush1.msra.mxu0 0.0
    %256 = vmatprep.subr.mxu0 0.0
    %257 = vmatpush1.msra.mxu0 0.0
    %258 = vmatprep.subr.mxu0 0.0
    %259 = vmatpush1.msra.mxu0 0.0
    %260 = vmatprep.subr.mxu0 0.0
    %261 = vmatpush1.msra.mxu0 0.0
    %262 = vmatprep.subr.mxu0 0.0
    %263 = vmatpush1.msra.mxu0 0.0
    %264 = vmatprep.subr.mxu0 0.0
    %265 = vmatpush1.msra.mxu0 0.0
    %266 = vmatprep.subr.mxu0 0.0
    %267 = vmatpush1.msra.mxu0 0.0
    %268 = vmatprep.subr.mxu0 0.0
    %269 = vmatpush1.msra.mxu0 0.0
    %270 = vmatprep.subr.mxu0 0.0
    %271 = vmatpush1.msra.mxu0 0.0
    %272 = vmatprep.subr.mxu0 0.0
    %273 = vmatpush1.msra.mxu0 0.0
    %274 = vmatprep.mubr.f32.mxu0 0.0
    %275 = vmatmul.mubr.f32.gmra.mrb[0].mxu0 %v208
    %v276 = vpop.f32.mrb[0].mxu0
    %v277 = vadd.f32 0.0, %v276
    %v278 = vpop.f32.mrb[0].mxu0
    %279 = vdwg.mxu0
    %280 = vmatprep.subr.mxu0 0.0
    %281 = vmatpush1.msra.mxu0 %v189
    %282 = vmatprep.subr.mxu0 0.0
    %283 = vmatpush1.msra.mxu0 %v190
    %284 = vmatprep.subr.mxu0 0.0
    %285 = vmatpush1.msra.mxu0 %v191
    %286 = vmatprep.subr.mxu0 0.0
    %287 = vmatpush1.msra.mxu0 %v192
    %288 = vmatprep.subr.mxu0 0.0
    %289 = vmatpush1.msra.mxu0 %v193
    %290 = vmatprep.subr.mxu0 0.0
    %291 = vmatpush1.msra.mxu0 %v194
    %292 = vmatprep.subr.mxu0 0.0
    %293 = vmatpush1.msra.mxu0 %v195
    %294 = vmatprep.subr.mxu0 0.0
    %295 = vmatpush1.msra.mxu0 %v196
    %296 = vmatprep.subr.mxu0 0.0
    %297 = vmatpush1.msra.mxu0 %v197
    %298 = vmatprep.subr.mxu0 0.0
    %299 = vmatpush1.msra.mxu0 %v198
    %300 = vmatprep.subr.mxu0 0.0
    %301 = vmatpush1.msra.mxu0 %v199
    %302 = vmatprep.subr.mxu0 0.0
    %303 = vmatpush1.msra.mxu0 %v200
    %304 = vmatprep.subr.mxu0 0.0
    %305 = vmatpush1.msra.mxu0 %v201
    %306 = vmatprep.subr.mxu0 0.0
    %307 = vmatpush1.msra.mxu0 %v202
    %308 = vmatprep.subr.mxu0 0.0
    %309 = vmatpush1.msra.mxu0 %v203
    %310 = vmatprep.subr.mxu0 0.0
    %311 = vmatpush1.msra.mxu0 %v204
    %312 = vmatprep.subr.mxu0 0.0
    %313 = vmatpush1.msra.mxu0 0.0
    %314 = vmatprep.subr.mxu0 0.0
    %315 = vmatpush1.msra.mxu0 0.0
    %316 = vmatprep.subr.mxu0 0.0
    %317 = vmatpush1.msra.mxu0 0.0
    %318 = vmatprep.subr.mxu0 0.0
    %319 = vmatpush1.msra.mxu0 0.0
    %320 = vmatprep.subr.mxu0 0.0
    %321 = vmatpush1.msra.mxu0 0.0
    %322 = vmatprep.subr.mxu0 0.0
    %323 = vmatpush1.msra.mxu0 0.0
    %324 = vmatprep.subr.mxu0 0.0
    %325 = vmatpush1.msra.mxu0 0.0
    %326 = vmatprep.subr.mxu0 0.0
    %327 = vmatpush1.msra.mxu0 0.0
    %328 = vmatprep.subr.mxu0 0.0
    %329 = vmatpush1.msra.mxu0 0.0
    %330 = vmatprep.subr.mxu0 0.0
    %331 = vmatpush1.msra.mxu0 0.0
    %332 = vmatprep.subr.mxu0 0.0
    %333 = vmatpush1.msra.mxu0 0.0
    %334 = vmatprep.subr.mxu0 0.0
    %335 = vmatpush1.msra.mxu0 0.0
    %336 = vmatprep.subr.mxu0 0.0
    %337 = vmatpush1.msra.mxu0 0.0
    %338 = vmatprep.subr.mxu0 0.0
    %339 = vmatpush1.msra.mxu0 0.0
    %340 = vmatprep.subr.mxu0 0.0
    %341 = vmatpush1.msra.mxu0 0.0
    %342 = vmatprep.subr.mxu0 0.0
    %343 = vmatpush1.msra.mxu0 0.0
    %344 = vmatprep.mubr.f32.mxu0 0.0
    %345 = vmatmul.mubr.f32.gmra.mrb[0].mxu0 %v188
    %v346 = vpop.f32.mrb[0].mxu0
    %v347 = vadd.f32 %v277, %v346
    %v348 = vpop.f32.mrb[0].mxu0
    %349 = vdwg.mxu0
    %v350 = vlaneseq
    %v351 = vshrl.u32 %v350, 7
    %v352 = vsub.s32 3, %v351
    %v353 = vrot.slane %v77, %v352
    %v354 = vadd.f32 %v347, %v353
    %v355 = vmax.f32 %v354, 0.0
    %v356 = vlaneseq
    %v357 = vshrl.u32 %v356, 7
    %v358 = vsub.s32 5, %v357
    %v359 = vrot.slane %v77, %v358
    %v360 = vmul.f32 %v355, %v359
    %361 = vadd.xlane.f32.xlu0 %v360
    %v362 = vpop.xlane.xlu0 %361
    %v363 = vlaneseq
    %v364 = vshrl.u32 %v363, 7
    %v365 = vsub.s32 4, %v364
    %v366 = vrot.slane %v77, %v365
    %v367 = vadd.f32 %v362, %v366
    %v368 = vmul.f32 %v367, 0.5
    %v369 = vtanh.pop %v368
    %v370 = vadd.f32 %v369, 1.0
    %v371 = vmul.f32 %v370, 0.5
    %373 = vset.pattern.permute.xlu0 0
    %374 = vperm.xlu0 %373, %v371
    %v375 = vpop.permute.xlu0 %374
    %377 = vst [vmem:[#allocation10] sm:$0xff] %v375
    // Predicated region
    $region42: #{tpu_custom_call.1} parent=1 // pred_check
      _
    $region43: #{tpu_custom_call.1} parent=1 // pred_check_branch
      %379 = sbr.rel (0) target = $region45
    $region44: #{tpu_custom_call.1} parent=1 // pred_region
      %s381 = ssub.s32 128, 128
      %382 = vsyncadd [#allocation4], %s381
      %s384 = sshll.u32 [#allocation10], 4
      %s385 = int_to_ptr.vmem [resolvable:$true] %s384
      %387 = dma.vmem_to_hbm [thread:$0]  %s385, 128, %s6, [#allocation4]
    $region45: #{tpu_custom_call.1} parent=1 // pred_fallthru
      _
    // Predicated region
    $region46: #{tpu_custom_call.1} parent=1 // pred_check
      _
    $region47: #{tpu_custom_call.1} parent=1 // pred_check_branch
      %389 = sbr.rel (0) target = $region49
    $region48: #{tpu_custom_call.1} parent=1 // pred_region
      %390 = dma.done [#allocation4], 128
    $region49: #{tpu_custom_call.1} parent=1 // pred_fallthru
      _
    %391 = vsyncpa [#allocation3], 1
    %392 = vsyncpa [#allocation6], 1
    %393 = vsyncpa [#allocation9], 1
    %394 = vsyncpa [#allocation4], 1

</llo_original>
